<compile_context>
chip_gen: v5e
topology: v5e:2x2
jax: 0.10.0
libtpu: 0.0.40
codegen_flags: <defaults>
</compile_context>

<pallas_src>
import functools

import jax
import jax.numpy as jnp
from jax.experimental import pallas as pl
from jax.experimental.pallas import tpu as pltpu

EPS = 1e-12  # matches torch.nn.functional.normalize's clamp_min on the norm

_VMEM_BUDGET = 40 * 1024 * 1024       # leave headroom below v7x's 64 MiB VMEM
_VMEM_LIMIT_BYTES = 48 * 1024 * 1024  # raise scoped limit (v5e default is 16 MiB)


def _contrastive_loss_kernel(q_ref, k_ref, out_ref, m_ref, l_ref, diag_ref,
                             *, inv_temperature: float, use_bf16_matmul: bool):
    qi = pl.program_id(0)          # query-tile index ("parallel")
    ki = pl.program_id(1)          # key-tile index   ("arbitrary", reduction)
    nk = pl.num_programs(1)

    q = q_ref[...].astype(jnp.float32)   # (TQ, D)
    k = k_ref[...].astype(jnp.float32)   # (TK, D)

    # L2-normalize along the feature dim with rsqrt (EUP); fold 1/T into the
    # query scale so the (TQ, TK) logits need no extra elementwise pass.
    inv_t = jnp.float32(inv_temperature)
    q_ss = jnp.maximum(jnp.sum(q * q, axis=1, keepdims=True), EPS * EPS)
    k_ss = jnp.maximum(jnp.sum(k * k, axis=1, keepdims=True), EPS * EPS)
    qn = q * (jax.lax.rsqrt(q_ss) * inv_t)     # (TQ, D), temperature folded in
    kn = k * jax.lax.rsqrt(k_ss)               # (TK, D)

    @pl.when(ki == 0)
    def _init():
        m_ref[...] = jnp.full_like(m_ref, -jnp.inf)
        l_ref[...] = jnp.zeros_like(l_ref)
        diag_ref[...] = jnp.zeros_like(diag_ref)

    if use_bf16_matmul:
        # v6e/v7x throughput option (f32 accumulation on the MXU). Slightly
        # relaxes numerical tolerance, so it is off in the small test below.
        qn_mm = qn.astype(jnp.bfloat16)
        kn_mm = kn.astype(jnp.bfloat16)
    else:
        qn_mm = qn
        kn_mm = kn

    # (TQ, TK) logits: contract over D of both operands directly (no .T).
    sim = jax.lax.dot_general(
        qn_mm, kn_mm,
        dimension_numbers=(((1,), (1,)), ((), ())),
        preferred_element_type=jnp.float32,
    )

    # Online softmax (logsumexp) update for this key tile.
    m_prev = m_ref[...]                                         # (TQ, 1)
    m_new = jnp.maximum(m_prev, jnp.max(sim, axis=1, keepdims=True))
    alpha = jnp.exp(m_prev - m_new)                             # 0 when m_prev=-inf
    l_ref[...] = alpha * l_ref[...] + jnp.sum(jnp.exp(sim - m_new),
                                              axis=1, keepdims=True)
    m_ref[...] = m_new

    # Positive-pair logit only lives in the diagonal tile (requires TQ == TK).
    @pl.when(qi == ki)
    def _diag():
        diag_ref[...] = jnp.sum(qn * kn, axis=1, keepdims=True)

    @pl.when(ki == nk - 1)
    def _finalize():
        # per-row loss: logsumexp(sim_row) - sim[row, row]
        out_ref[...] = m_ref[...] + jnp.log(l_ref[...]) - diag_ref[...]


def _pick_tile(b: int, d: int, itemsize: int) -> int:
    """Largest sublane-aligned tile dividing B whose working set fits VMEM.

    Key-side HBM traffic scales as (B / tile), so bigger tiles win as long as
    the double-buffered input tiles + the (tile, tile) f32 logits intermediate
    stay inside the VMEM budget.
    """
    for t in (1024, 512, 256, 128, 64, 32, 16, 8):
        if t <= b and b % t == 0:
            need = 4 * t * d * itemsize      # q & k tiles, double-buffered
            need += 2 * t * t * 4            # logits + exp(logits) temporaries
            need += 4 * t * 128 * 4          # out block + 3 scratch columns
            if need <= _VMEM_BUDGET:
                return t
    return b  # tiny / awkward batch: a single full-extent tile is always legal


def contrastive_loss(queries: jax.Array, keys: jax.Array,
                     *, temperature: float = 0.07,
                     use_bf16_matmul: bool = False) -> jax.Array:
    """queries, keys: (B, D). Returns scalar float32 loss."""
    assert queries.shape == keys.shape
    B, D = queries.shape
    tile = _pick_tile(B, D, queries.dtype.itemsize)
    assert B % tile == 0
    n_tiles = B // tile

    kernel = functools.partial(_contrastive_loss_kernel,
                               inv_temperature=1.0 / temperature,
                               use_bf16_matmul=use_bf16_matmul)

    per_row = pl.pallas_call(
        kernel,
        out_shape=jax.ShapeDtypeStruct((B, 1), jnp.float32),
        grid_spec=pltpu.PrefetchScalarGridSpec(
            num_scalar_prefetch=0,
            grid=(n_tiles, n_tiles),
            in_specs=[
                pl.BlockSpec((tile, D), lambda qi, ki: (qi, 0)),   # query tile
                pl.BlockSpec((tile, D), lambda qi, ki: (ki, 0)),   # key tile
            ],
            out_specs=pl.BlockSpec((tile, 1), lambda qi, ki: (qi, 0)),
            scratch_shapes=[
                pltpu.VMEM((tile, 1), jnp.float32),   # running max m
                pltpu.VMEM((tile, 1), jnp.float32),   # running sum-exp l
                pltpu.VMEM((tile, 1), jnp.float32),   # diagonal (positive) logit
            ],
        ),
        compiler_params=pltpu.CompilerParams(
            dimension_semantics=("parallel", "arbitrary"),
            vmem_limit_bytes=_VMEM_LIMIT_BYTES),
    )(queries, keys)

    return jnp.mean(per_row)


def _reference_loss(queries, keys, temperature=0.07):
    # Pure-JAX reference for sanity checking.
    qn = queries / jnp.maximum(
        jnp.linalg.norm(queries, axis=1, keepdims=True), EPS)
    kn = keys / jnp.maximum(jnp.linalg.norm(keys, axis=1, keepdims=True), EPS)
    sim = (qn @ kn.T) / temperature
    idx = jnp.arange(sim.shape[0])
    lse = jax.scipy.special.logsumexp(sim, axis=1)
    return jnp.mean(lse - sim[idx, idx])


if __name__ == "__main__":
    key = jax.random.PRNGKey(0)
    kq, kk = jax.random.split(key)
    B, D = 8, 32
    queries = jax.random.normal(kq, (B, D), dtype=jnp.float32)
    keys = jax.random.normal(kk, (B, D), dtype=jnp.float32)

    loss = contrastive_loss(queries, keys)
    jax.block_until_ready(loss)

    ref = _reference_loss(queries, keys)
    assert jnp.allclose(loss, ref, atol=1e-4, rtol=1e-4), (loss, ref)

    print("KERNEL_OK")
</pallas_src>

<mosaic_0001>
module attributes {stable_mosaic.version = 11 : i64} {
  func.func @_contrastive_loss_kernel(%arg0: i32, %arg1: i32, %arg2: memref<8x32xf32, #tpu.memory_space<vmem>>, %arg3: memref<8x32xf32, #tpu.memory_space<vmem>>, %arg4: memref<8x1xf32, #tpu.memory_space<vmem>>, %arg5: memref<8x1xf32, #tpu.memory_space<vmem>>, %arg6: memref<8x1xf32, #tpu.memory_space<vmem>>, %arg7: memref<8x1xf32, #tpu.memory_space<vmem>>) attributes {dimension_semantics = [#tpu.dimension_semantics<parallel>, #tpu.dimension_semantics<arbitrary>], iteration_bounds = array<i64: 1, 1>, scalar_prefetch = 0 : i64, scratch_operands = 3 : i64, tpu.core_type = #tpu.core_type<tc>, window_params = [{transform_indices = @transform_0, window_bounds = array<i64: 8, 32>}, {transform_indices = @transform_1, window_bounds = array<i64: 8, 32>}, {transform_indices = @transform_2, window_bounds = array<i64: 8, 1>}]} {
    %c0 = arith.constant 0 : index
    %c0_0 = arith.constant 0 : index
    %0 = vector.load %arg2[%c0, %c0_0] : memref<8x32xf32, #tpu.memory_space<vmem>>, vector<8x32xf32>
    %c0_1 = arith.constant 0 : index
    %c0_2 = arith.constant 0 : index
    %1 = vector.load %arg3[%c0_1, %c0_2] : memref<8x32xf32, #tpu.memory_space<vmem>>, vector<8x32xf32>
    %2 = arith.mulf %0, %0 : vector<8x32xf32>
    %cst = arith.constant dense<0.000000e+00> : vector<8xf32>
    %3 = vector.multi_reduction <add>, %2, %cst [1] : vector<8x32xf32> to vector<8xf32>
    %4 = vector.shape_cast %3 : vector<8xf32> to vector<8x1xf32>
    %cst_3 = arith.constant 1.000000e-24 : f32
    %5 = vector.broadcast %cst_3 : f32 to vector<8x1xf32>
    %6 = arith.maximumf %4, %5 : vector<8x1xf32>
    %7 = arith.mulf %1, %1 : vector<8x32xf32>
    %cst_4 = arith.constant dense<0.000000e+00> : vector<8xf32>
    %8 = vector.multi_reduction <add>, %7, %cst_4 [1] : vector<8x32xf32> to vector<8xf32>
    %9 = vector.shape_cast %8 : vector<8xf32> to vector<8x1xf32>
    %cst_5 = arith.constant 1.000000e-24 : f32
    %10 = vector.broadcast %cst_5 : f32 to vector<8x1xf32>
    %11 = arith.maximumf %9, %10 : vector<8x1xf32>
    %12 = math.rsqrt %6 : vector<8x1xf32>
    %cst_6 = arith.constant 14.2857141 : f32
    %13 = vector.broadcast %cst_6 : f32 to vector<8x1xf32>
    %14 = arith.mulf %12, %13 : vector<8x1xf32>
    %15 = vector.broadcast %14 : vector<8x1xf32> to vector<8x32xf32>
    %16 = arith.mulf %0, %15 : vector<8x32xf32>
    %17 = math.rsqrt %11 : vector<8x1xf32>
    %18 = vector.broadcast %17 : vector<8x1xf32> to vector<8x32xf32>
    %19 = arith.mulf %1, %18 : vector<8x32xf32>
    %c0_i32 = arith.constant 0 : i32
    %20 = arith.cmpi eq, %arg1, %c0_i32 : i32
    %21 = arith.extui %20 : i1 to i32
    %c0_i32_7 = arith.constant 0 : i32
    %22 = arith.cmpi ne, %21, %c0_i32_7 : i32
    scf.if %22 {
      %cst_22 = arith.constant 0xFF800000 : f32
      %46 = vector.broadcast %cst_22 : f32 to vector<8x1xf32>
      %c0_23 = arith.constant 0 : index
      %c0_24 = arith.constant 0 : index
      %47 = vector.load %arg5[%c0_23, %c0_24] : memref<8x1xf32, #tpu.memory_space<vmem>>, vector<8x1xf32>
      tpu.vector_store %arg5[%c0_23, %c0_24], %46 {strides = array<i32>} : memref<8x1xf32, #tpu.memory_space<vmem>>, vector<8x1xf32>,
      %cst_25 = arith.constant 0.000000e+00 : f32
      %48 = vector.broadcast %cst_25 : f32 to vector<8x1xf32>
      %c0_26 = arith.constant 0 : index
      %c0_27 = arith.constant 0 : index
      %49 = vector.load %arg6[%c0_26, %c0_27] : memref<8x1xf32, #tpu.memory_space<vmem>>, vector<8x1xf32>
      tpu.vector_store %arg6[%c0_26, %c0_27], %48 {strides = array<i32>} : memref<8x1xf32, #tpu.memory_space<vmem>>, vector<8x1xf32>,
      %cst_28 = arith.constant 0.000000e+00 : f32
      %50 = vector.broadcast %cst_28 : f32 to vector<8x1xf32>
      %c0_29 = arith.constant 0 : index
      %c0_30 = arith.constant 0 : index
      %51 = vector.load %arg7[%c0_29, %c0_30] : memref<8x1xf32, #tpu.memory_space<vmem>>, vector<8x1xf32>
      tpu.vector_store %arg7[%c0_29, %c0_30], %50 {strides = array<i32>} : memref<8x1xf32, #tpu.memory_space<vmem>>, vector<8x1xf32>,
    } else {
    }
    %cst_8 = arith.constant dense<0.000000e+00> : vector<8x8xf32>
    %23 = tpu.matmul %16, %19, %cst_8 {dimension_numbers = #tpu.dot_dimension_numbers<[1], [1], [0], [0], [0, 0, 1, 0], [], []>} : vector<8x32xf32>, vector<8x32xf32>, vector<8x8xf32> -> vector<8x8xf32>
    %c0_9 = arith.constant 0 : index
    %c0_10 = arith.constant 0 : index
    %24 = vector.load %arg5[%c0_9, %c0_10] : memref<8x1xf32, #tpu.memory_space<vmem>>, vector<8x1xf32>
    %cst_11 = arith.constant dense<0xFF800000> : vector<8xf32>
    %25 = vector.multi_reduction <maximumf>, %23, %cst_11 [1] : vector<8x8xf32> to vector<8xf32>
    %26 = vector.shape_cast %25 : vector<8xf32> to vector<8x1xf32>
    %27 = arith.maximumf %24, %26 : vector<8x1xf32>
    %28 = arith.subf %24, %27 : vector<8x1xf32>
    %29 = math.exp %28 : vector<8x1xf32>
    %c0_12 = arith.constant 0 : index
    %c0_13 = arith.constant 0 : index
    %30 = vector.load %arg6[%c0_12, %c0_13] : memref<8x1xf32, #tpu.memory_space<vmem>>, vector<8x1xf32>
    %31 = arith.mulf %29, %30 : vector<8x1xf32>
    %32 = vector.broadcast %27 : vector<8x1xf32> to vector<8x8xf32>
    %33 = arith.subf %23, %32 : vector<8x8xf32>
    %34 = math.exp %33 : vector<8x8xf32>
    %cst_14 = arith.constant dense<0.000000e+00> : vector<8xf32>
    %35 = vector.multi_reduction <add>, %34, %cst_14 [1] : vector<8x8xf32> to vector<8xf32>
    %36 = vector.shape_cast %35 : vector<8xf32> to vector<8x1xf32>
    %37 = arith.addf %31, %36 : vector<8x1xf32>
    %c0_15 = arith.constant 0 : index
    %c0_16 = arith.constant 0 : index
    %38 = vector.load %arg6[%c0_15, %c0_16] : memref<8x1xf32, #tpu.memory_space<vmem>>, vector<8x1xf32>
    tpu.vector_store %arg6[%c0_15, %c0_16], %37 {strides = array<i32>} : memref<8x1xf32, #tpu.memory_space<vmem>>, vector<8x1xf32>,
    %c0_17 = arith.constant 0 : index
    %c0_18 = arith.constant 0 : index
    %39 = vector.load %arg5[%c0_17, %c0_18] : memref<8x1xf32, #tpu.memory_space<vmem>>, vector<8x1xf32>
    tpu.vector_store %arg5[%c0_17, %c0_18], %27 {strides = array<i32>} : memref<8x1xf32, #tpu.memory_space<vmem>>, vector<8x1xf32>,
    %40 = arith.cmpi eq, %arg0, %arg1 : i32
    %41 = arith.extui %40 : i1 to i32
    %c0_i32_19 = arith.constant 0 : i32
    %42 = arith.cmpi ne, %41, %c0_i32_19 : i32
    scf.if %42 {
      %46 = arith.mulf %16, %19 : vector<8x32xf32>
      %cst_22 = arith.constant dense<0.000000e+00> : vector<8xf32>
      %47 = vector.multi_reduction <add>, %46, %cst_22 [1] : vector<8x32xf32> to vector<8xf32>
      %48 = vector.shape_cast %47 : vector<8xf32> to vector<8x1xf32>
      %c0_23 = arith.constant 0 : index
      %c0_24 = arith.constant 0 : index
      %49 = vector.load %arg7[%c0_23, %c0_24] : memref<8x1xf32, #tpu.memory_space<vmem>>, vector<8x1xf32>
      tpu.vector_store %arg7[%c0_23, %c0_24], %48 {strides = array<i32>} : memref<8x1xf32, #tpu.memory_space<vmem>>, vector<8x1xf32>,
    } else {
    }
    %c0_i32_20 = arith.constant 0 : i32
    %43 = arith.cmpi eq, %arg1, %c0_i32_20 : i32
    %44 = arith.extui %43 : i1 to i32
    %c0_i32_21 = arith.constant 0 : i32
    %45 = arith.cmpi ne, %44, %c0_i32_21 : i32
    scf.if %45 {
      %c0_22 = arith.constant 0 : index
      %c0_23 = arith.constant 0 : index
      %46 = vector.load %arg5[%c0_22, %c0_23] : memref<8x1xf32, #tpu.memory_space<vmem>>, vector<8x1xf32>
      %c0_24 = arith.constant 0 : index
      %c0_25 = arith.constant 0 : index
      %47 = vector.load %arg6[%c0_24, %c0_25] : memref<8x1xf32, #tpu.memory_space<vmem>>, vector<8x1xf32>
      %48 = math.log %47 : vector<8x1xf32>
      %49 = arith.addf %46, %48 : vector<8x1xf32>
      %c0_26 = arith.constant 0 : index
      %c0_27 = arith.constant 0 : index
      %50 = vector.load %arg7[%c0_26, %c0_27] : memref<8x1xf32, #tpu.memory_space<vmem>>, vector<8x1xf32>
      %51 = arith.subf %49, %50 : vector<8x1xf32>
      %c0_28 = arith.constant 0 : index
      %c0_29 = arith.constant 0 : index
      %52 = vector.load %arg4[%c0_28, %c0_29] : memref<8x1xf32, #tpu.memory_space<vmem>>, vector<8x1xf32>
      tpu.vector_store %arg4[%c0_28, %c0_29], %51 {strides = array<i32>} : memref<8x1xf32, #tpu.memory_space<vmem>>, vector<8x1xf32>,
    } else {
    }
    return
  }
  func.func @transform_0(%arg0: i32, %arg1: i32) -> (i32, i32) {
    %c0_i32 = arith.constant 0 : i32
    %c0_i32_0 = arith.constant 0 : i32
    return %arg0, %c0_i32 : i32, i32
  }
  func.func @transform_1(%arg0: i32, %arg1: i32) -> (i32, i32) {
    %c0_i32 = arith.constant 0 : i32
    %c0_i32_0 = arith.constant 0 : i32
    return %arg1, %c0_i32 : i32, i32
  }
  func.func @transform_2(%arg0: i32, %arg1: i32) -> (i32, i32) {
    %c0_i32 = arith.constant 0 : i32
    %c0_i32_0 = arith.constant 0 : i32
    return %arg0, %c0_i32 : i32, i32
  }
}

</mosaic_0001>

<llo_original>
// kernel: tpu_custom_call.1
$region0: #{tpu_custom_call.1}
  #allocation0 [shape = 'u32[]', space=smem, size = 0x4, offset = 0x4, fixed_abs, tag = 'smem constant byte address 0x4 - core index']
  #allocation1 [shape = 'u32[72,128]{1,0:T(1,128)}', space=vmem, size = 0x9000, scoped, tag = 'internal scratch']
  #allocation2 [shape = 'f32[8,1]{1,0:T(8,128)}', space=vmem, size = 0x1000, scoped, tag = 'scratch operand']
  #allocation3 [shape = 'f32[8,1]{1,0:T(8,128)}', space=vmem, size = 0x1000, scoped, tag = 'scratch operand']
  #allocation4 [shape = 'f32[8,1]{1,0:T(8,128)}', space=vmem, size = 0x1000, scoped, tag = 'scratch operand']
  %s0 = inlined_call_operand.hbm [shape: f32[8,32], index: 0, kind: input, shape index: {}]
  %s1 = inlined_call_operand.hbm [shape: f32[8,32], index: 1, kind: input, shape index: {}]
  %s2 = inlined_call_operand.vmem [shape: f32[8,1], index: 2, kind: output, shape index: {}]
  %s3 = sld [smem:[#allocation0]]
  $region38: #{tpu_custom_call.1} parent=0
    _
  %s5 = ssub.s32 1, %s3
  %s6 = scalar_select 0, %s5, %s3
  $region1: #{tpu_custom_call.1} parent=0
    #allocation5 [shape = 'u8[4096]{0}', space=vmem, size = 0x1000, scoped, tag = 'input window, operand 0, single buffered']
    #allocation6 [shape = 's32[1]{0}', space=sflag, size = 0x4, scoped, tag = 'scoped memory for tpu_custom_call.1']
    #allocation7 [shape = 'u8[4096]{0}', space=vmem, size = 0x1000, scoped, tag = 'input window, operand 1, single buffered']
    #allocation8 [shape = 's32[1]{0}', space=sflag, size = 0x4, scoped, tag = 'scoped memory for tpu_custom_call.1']
    %7 = vsyncpa [#allocation6], 0
    %8 = vsyncpa [#allocation8], 0
    // Predicated region
    $region2: #{tpu_custom_call.1} parent=1 // pred_check
      _
    $region3: #{tpu_custom_call.1} parent=1 // pred_check_branch
      %10 = sbr.rel (0) target = $region5
    $region4: #{tpu_custom_call.1} parent=1 // pred_region
      %12 = vsyncadd [#allocation6], 0
      %s14 = sshll.u32 %s0, 4
      %s15 = int_to_ptr.hbm [resolvable:$true] %s14
      %s16 = sshll.u32 [#allocation5], 4
      %s17 = int_to_ptr.vmem [resolvable:$true] %s16
      %19 = dma.hbm_to_vmem [thread:$0]  %s15, 128, %s17, [#allocation6]
    $region5: #{tpu_custom_call.1} parent=1 // pred_fallthru
      _
    // Predicated region
    $region6: #{tpu_custom_call.1} parent=1 // pred_check
      _
    $region7: #{tpu_custom_call.1} parent=1 // pred_check_branch
      %21 = sbr.rel (0) target = $region9
    $region8: #{tpu_custom_call.1} parent=1 // pred_region
      %23 = vsyncadd [#allocation8], 0
      %s25 = sshll.u32 %s1, 4
      %s26 = int_to_ptr.hbm [resolvable:$true] %s25
      %s27 = sshll.u32 [#allocation7], 4
      %s28 = int_to_ptr.vmem [resolvable:$true] %s27
      %30 = dma.hbm_to_vmem [thread:$0]  %s26, 128, %s28, [#allocation8]
    $region9: #{tpu_custom_call.1} parent=1 // pred_fallthru
      _
    // Predicated region
    $region10: #{tpu_custom_call.1} parent=1 // pred_check
      _
    $region11: #{tpu_custom_call.1} parent=1 // pred_check_branch
      %32 = sbr.rel (0) target = $region13
    $region12: #{tpu_custom_call.1} parent=1 // pred_region
      %34 = dma.done [#allocation6], 128
    $region13: #{tpu_custom_call.1} parent=1 // pred_fallthru
      _
    // Predicated region
    $region14: #{tpu_custom_call.1} parent=1 // pred_check
      _
    $region15: #{tpu_custom_call.1} parent=1 // pred_check_branch
      %36 = sbr.rel (0) target = $region17
    $region16: #{tpu_custom_call.1} parent=1 // pred_region
      %38 = dma.done [#allocation8], 128
    $region17: #{tpu_custom_call.1} parent=1 // pred_fallthru
      _
    %v39 = vld [vmem:[#allocation5] sm:$0xff]
    %v40 = vld [vmem:[#allocation7] sm:$0xff]
    %v41 = vmul.f32 %v39, %v39
    %vm42 = vcmask 261120
    %v43 = vsel %vm42, %v41, 0.0
    %44 = vadd.xlane.f32.xlu0 %v43
    %v45 = vpop.xlane.xlu0 %44
    %v46 = vmax.f32 %v45, 1e-24
    %v47 = vmul.f32 %v40, %v40
    %v48 = vsel %vm42, %v47, 0.0
    %49 = vadd.xlane.f32.xlu0 %v48
    %v50 = vpop.xlane.xlu0 %49
    %v51 = vmax.f32 %v50, 1e-24
    %v52 = vrsqrt.pop %v46
    %v53 = vmul.f32 %v52, %v46
    %v54 = vmul.f32 %v53, %v52
    %v55 = vmul.f32 0.5, %v54
    %v56 = vsub.f32 1.5, %v55
    %v57 = vmul.f32 %v52, %v56
    %vm58 = vweird.f32 %v46
    %vm59 = vweird.f32 %v52
    %vm60 = vmor %vm58, %vm59
    %v61 = vsel %vm60, %v52, %v57
    %v62 = vmul.f32 %v61, 14.285714
    %v63 = vmul.f32 %v39, %v62
    %v64 = vrsqrt.pop %v51
    %v65 = vmul.f32 %v64, %v51
    %v66 = vmul.f32 %v65, %v64
    %v67 = vmul.f32 0.5, %v66
    %v68 = vsub.f32 1.5, %v67
    %v69 = vmul.f32 %v64, %v68
    %vm70 = vweird.f32 %v51
    %vm71 = vweird.f32 %v64
    %vm72 = vmor %vm70, %vm71
    %v73 = vsel %vm72, %v64, %v69
    %v74 = vmul.f32 %v40, %v73
    %p75 = scmp.eq.s32.totalorder 0, 0
    // Predicated region
    $region18: #{tpu_custom_call.1} parent=1 // pred_check
      %p76 = pneg %p75
    $region19: #{tpu_custom_call.1} parent=1 // pred_check_branch
      %78 = sbr.rel (%p76) target = $region21
    $region20: #{tpu_custom_call.1} parent=1 // pred_region
      %vm79 = vcmask 7168
      %80 = vst.msk [vmem:[#allocation2] sm:$0xff] %vm79, -inf
      %81 = vst.msk [vmem:[#allocation3] sm:$0xff] %vm79, 0.0
      %82 = vst.msk [vmem:[#allocation4] sm:$0xff] %vm79, 0.0
    $region21: #{tpu_custom_call.1} parent=1 // pred_fallthru
      _
    %v84 = vsel %vm42, %v63, 0
    %v87 = vsel %vm42, %v74, 0
    %89 = vmatpush.xpose.msra.mxu0 0.0
    %90 = vmatpush.xpose.msra.mxu0 0.0
    %91 = vmatpush.xpose.msra.mxu0 0.0
    %92 = vmatpush.xpose.msra.mxu0 0.0
    %93 = vmatpush.xpose.msra.mxu0 0.0
    %94 = vmatpush.xpose.msra.mxu0 0.0
    %95 = vmatpush.xpose.msra.mxu0 0.0
    %96 = vmatpush.xpose.msra.mxu0 0.0
    %97 = vmatpush.xpose.msra.mxu0 0.0
    %98 = vmatpush.xpose.msra.mxu0 0.0
    %99 = vmatpush.xpose.msra.mxu0 0.0
    %100 = vmatpush.xpose.msra.mxu0 0.0
    %101 = vmatpush.xpose.msra.mxu0 0.0
    %102 = vmatpush.xpose.msra.mxu0 0.0
    %103 = vmatpush.xpose.msra.mxu0 0.0
    %104 = vmatpush.xpose.msra.mxu0 %v87
    %105 = vmatmul.f32.gmra.mxu0 %v84
    %v106 = vpop.f32.mrf.mxu0
    %v107 = vadd.f32 0.0, %v106
    %108 = vdwg.mxu0
    %v109 = vld [vmem:[#allocation2] sm:$0xff]
    %vm110 = vcmask 64512
    %v111 = vsel %vm110, %v107, -inf
    %112 = vmax.xlane.f32.xlu0 %v111
    %v113 = vpop.xlane.xlu0 %112
    %v114 = vmax.f32 %v109, %v113
    %v115 = vsub.f32 %v109, %v114
    %v116 = vmul.f32 %v115, 1.442695
    %v117 = vpow.pop %v116
    %v118 = vld [vmem:[#allocation3] sm:$0xff]
    %v119 = vmul.f32 %v117, %v118
    %121 = vset.pattern.permute.xlu0 0
    %122 = vperm.xlu0 %121, %v114
    %v123 = vpop.permute.xlu0 %122
    %v125 = vsub.f32 %v107, %v123
    %v126 = vmul.f32 %v125, 1.442695
    %v127 = vpow.pop %v126
    %v128 = vsel %vm110, %v127, 0.0
    %129 = vadd.xlane.f32.xlu0 %v128
    %v130 = vpop.xlane.xlu0 %129
    %v131 = vadd.f32 %v119, %v130
    %vm132 = vcmask 7168
    %133 = vst.msk [vmem:[#allocation3] sm:$0xff] %vm132, %v131
    %134 = vst.msk [vmem:[#allocation2] sm:$0xff] %vm132, %v114
    %p135 = scmp.eq.s32.totalorder 0, 0
    // Predicated region
    $region22: #{tpu_custom_call.1} parent=1 // pred_check
      %p136 = pneg %p135
    $region23: #{tpu_custom_call.1} parent=1 // pred_check_branch
      %138 = sbr.rel (%p136) target = $region25
    $region24: #{tpu_custom_call.1} parent=1 // pred_region
      %v139 = vmul.f32 %v63, %v74
      %v140 = vsel %vm42, %v139, 0.0
      %141 = vadd.xlane.f32.xlu0 %v140
      %v142 = vpop.xlane.xlu0 %141
      %143 = vst.msk [vmem:[#allocation4] sm:$0xff] %vm132, %v142
    $region25: #{tpu_custom_call.1} parent=1 // pred_fallthru
      _
    // Predicated region
    $region26: #{tpu_custom_call.1} parent=1 // pred_check
      %p144 = pneg %p75
    $region27: #{tpu_custom_call.1} parent=1 // pred_check_branch
      %146 = sbr.rel (%p144) target = $region29
    $region28: #{tpu_custom_call.1} parent=1 // pred_region
      %v147 = vld [vmem:[#allocation2] sm:$0xff]
      %v148 = vld [vmem:[#allocation3] sm:$0xff]
      %v149 = vlog2.pop %v148
      %v150 = vmul.f32 %v149, 0.6931472
      %v151 = vadd.f32 %v147, %v150
      %v152 = vld [vmem:[#allocation4] sm:$0xff]
      %v153 = vsub.f32 %v151, %v152
      %154 = vst.msk [vmem:[%s2] sm:$0xff] %vm132, %v153
    $region29: #{tpu_custom_call.1} parent=1 // pred_fallthru
      _
    // Predicated region
    $region30: #{tpu_custom_call.1} parent=1 // pred_check
      _
    $region31: #{tpu_custom_call.1} parent=1 // pred_check_branch
      %156 = sbr.rel (0) target = $region33
    $region32: #{tpu_custom_call.1} parent=1 // pred_region
      _
    $region33: #{tpu_custom_call.1} parent=1 // pred_fallthru
      _
    // Predicated region
    $region34: #{tpu_custom_call.1} parent=1 // pred_check
      _
    $region35: #{tpu_custom_call.1} parent=1 // pred_check_branch
      %158 = sbr.rel (0) target = $region37
    $region36: #{tpu_custom_call.1} parent=1 // pred_region
      _
    $region37: #{tpu_custom_call.1} parent=1 // pred_fallthru
      _
    %159 = vsyncpa [#allocation6], 1
    %160 = vsyncpa [#allocation8], 1

</llo_original>
